<compile_context>
chip_gen: v7x
topology: tpu7x:2x2x1
jax: 0.10.0
libtpu: 0.0.40
codegen_flags: <defaults>
</compile_context>

<pallas_src>
import functools

import jax
import jax.numpy as jnp
import numpy as np
from jax import lax
from jax.experimental import pallas as pl
from jax.experimental.pallas import tpu as pltpu


def _kolmogorov_bias_kernel(x_ref, w1T_ref, bw_ref, g_ref, o_ref, *,
                            scale, inv_eps):
    """Per-grid-step shapes:
         x_ref  : (TB, D) f32  streamed batch tile, native [B, D] layout
         w1T_ref: (H, D)  f32  W1^T, resident across the grid
         bw_ref : (H, 2)  f32  packed [b1 | W2], resident
         g_ref  : (H, H)  f32  Gram matrix W1^T @ W1, resident
         o_ref  : (1, TB) f32  bias row (lane dense)
    """
    bw = bw_ref[...]
    b1 = bw[:, 0:1]                     # (H, 1)
    w2 = bw[:, 1:2]                     # (H, 1)

    # z^T = W1^T @ x^T -> (H, TB); contract the shared D axis directly so x
    # never needs a wrapper-side transpose (MXU handles the trans-rhs form).
    z = lax.dot_general(w1T_ref[...], x_ref[...],
                        dimension_numbers=(((1,), (1,)), ((), ())),
                        preferred_element_type=jnp.float32)
    z = z + b1                          # broadcast over lanes (batch)
    t = jnp.tanh(z)                     # single tanh (EUP)
    v = (1.0 - t * t) * w2              # (H, TB)

    # |grad_b|^2 = v_b^T G v_b = sum_h v[h, b] * (G @ v)[h, b]
    gv = jnp.dot(g_ref[...], v, preferred_element_type=jnp.float32)   # (H, TB)
    gs = jnp.sum(v * gv, axis=0, keepdims=True)                       # (1, TB)
    gs = jnp.maximum(gs, 0.0)           # guard tiny negative round-off

    # -(lambd/beta) * (log(gs + eps) - log(eps)) == scale * log(1 + gs/eps)
    o_ref[...] = (scale * jnp.log(gs * inv_eps + 1.0)).astype(o_ref.dtype)


def _pick_batch_tile(batch, d, h):
    """Lane-aligned batch tile.

    As large as possible (cap 4096 lanes, VMEM-budgeted) to amortize the
    ~0.35 us per-grid-step cost, but keeping >= 2 grid steps whenever the
    batch spans more than one 128-lane group so v7x's two TensorCores both
    get work under dimension_semantics=("parallel",).
    """
    groups = -(-batch // 128)
    if groups <= 1:
        return 128
    # VMEM budget: 2 double-buffered (TB, D) f32 x tiles + ~6 live (H, TB)
    # f32 temporaries; keep under ~20 MiB (headroom inside v7x's 32 MiB
    # default scoped limit / 64 MiB physical).
    bytes_per_lane = 4 * (2 * d + 6 * h)
    cap_groups = max(1, (20 * 1024 * 1024) // (128 * bytes_per_lane))
    cap_groups = min(cap_groups, 32)          # <= 4096 lanes per tile
    half = -(-groups // 2)                    # >= 2 grid steps
    return max(1, min(half, cap_groups)) * 128


def kolmogorov_bias(x, W1, b1, W2, b2=None, *, beta, epsilon=1e-6, lambd=1.0,
                    batch_tile=None):
    """Kolmogorov bias of a 2-layer tanh committor MLP.

    x : [B, D] float32;  W1 : [D, H];  b1 : [H];  W2 : [H, 1];  b2 unused
    (it never appears in dq/dx).  Returns bias of shape [B] (float32).
    """
    del b2  # does not affect the gradient
    B, D = x.shape
    D2, H = W1.shape
    assert D2 == D, "W1 must be [D, H]"

    if batch_tile is None:
        TB = _pick_batch_tile(B, D, H)
    else:
        TB = int(batch_tile)
        assert TB % 128 == 0, "batch_tile must be a multiple of 128"
    nb = pl.cdiv(B, TB)
    B_pad = nb * TB

    f32 = jnp.float32
    x32 = x.astype(f32)
    if B < TB:
        # Degenerate tiny-batch case only: keep block_shape <= array shape.
        x32 = jnp.pad(x32, ((0, TB - B), (0, 0)))

    # Tiny resident operands prepared once in the wrapper (all f32).
    w1T = W1.T.astype(f32)                                  # (H, D)
    G = w1T @ W1.astype(f32)                                # (H, H) Gram
    bw = jnp.concatenate(
        [jnp.reshape(b1, (H, 1)), jnp.reshape(W2, (H, 1))], axis=1
    ).astype(f32)                                           # (H, 2)

    kernel = functools.partial(
        _kolmogorov_bias_kernel,
        scale=float(-lambd / beta),
        inv_eps=float(1.0 / epsilon),
    )

    out = pl.pallas_call(
        kernel,
        out_shape=jax.ShapeDtypeStruct((1, B_pad), f32),
        grid=(nb,),
        in_specs=[
            pl.BlockSpec((TB, D), lambda i: (i, 0)),   # x tile, streamed, contiguous
            pl.BlockSpec((H, D), lambda i: (0, 0)),    # W1^T, resident
            pl.BlockSpec((H, 2), lambda i: (0, 0)),    # [b1 | W2], resident
            pl.BlockSpec((H, H), lambda i: (0, 0)),    # Gram, resident
        ],
        out_specs=pl.BlockSpec((1, TB), lambda i: (0, i)),
        compiler_params=pltpu.CompilerParams(
            dimension_semantics=("parallel",),         # batch tiles independent
            vmem_limit_bytes=32 * 1024 * 1024,
        ),
    )(x32, w1T, bw, G)

    return out[0, :B]


if __name__ == "__main__":
    B, D, H = 300, 48, 32
    BETA, EPS, LAMBD = 2.0, 1e-6, 1.0

    key = jax.random.PRNGKey(0)
    kx, k1, kb1, k2, kb2 = jax.random.split(key, 5)
    x = jax.random.normal(kx, (B, D), dtype=jnp.float32)
    W1 = jax.random.normal(k1, (D, H), dtype=jnp.float32) / np.sqrt(D)
    b1 = 0.1 * jax.random.normal(kb1, (H,), dtype=jnp.float32)
    W2 = jax.random.normal(k2, (H, 1), dtype=jnp.float32) / np.sqrt(H)
    b2 = jax.random.normal(kb2, (1,), dtype=jnp.float32)

    fn = jax.jit(lambda x_, w1_, b1_, w2_: kolmogorov_bias(
        x_, w1_, b1_, w2_, beta=BETA, epsilon=EPS, lambd=LAMBD))
    bias = fn(x, W1, b1, W2)
    jax.block_until_ready(bias)

    # Pure-JAX reference mirroring the PyTorch module (autodiff gradient,
    # grad_outputs = ones <=> grad of the sum of q over the batch).
    def q_sum(xx):
        return jnp.sum(jnp.tanh(xx @ W1 + b1) @ W2 + b2)

    grads = jax.grad(q_sum)(x)                          # [B, D]
    gs_ref = jnp.sum(grads ** 2, axis=1)                # [B]
    bias_ref = -LAMBD * (1.0 / BETA) * (jnp.log(gs_ref + EPS) - jnp.log(EPS))

    assert bias.shape == (B,)
    np.testing.assert_allclose(np.asarray(bias), np.asarray(bias_ref),
                               rtol=2e-2, atol=2e-2)
    print("KERNEL_OK")
</pallas_src>

<mosaic_0001>
module attributes {stable_mosaic.version = 11 : i64} {
  func.func @_kolmogorov_bias_kernel(%arg0: i32, %arg1: memref<256x48xf32, #tpu.memory_space<vmem>>, %arg2: memref<32x48xf32, #tpu.memory_space<vmem>>, %arg3: memref<32x2xf32, #tpu.memory_space<vmem>>, %arg4: memref<32x32xf32, #tpu.memory_space<vmem>>, %arg5: memref<1x256xf32, #tpu.memory_space<vmem>>) attributes {dimension_semantics = [#tpu.dimension_semantics<parallel>], iteration_bounds = array<i64: 2>, scalar_prefetch = 0 : i64, scratch_operands = 0 : i64, tpu.core_type = #tpu.core_type<tc>, window_params = [{transform_indices = @transform_0, window_bounds = array<i64: 256, 48>}, {pipeline_mode = #tpu.pipeline_mode<synchronous>, transform_indices = @transform_1, window_bounds = array<i64: 32, 48>}, {pipeline_mode = #tpu.pipeline_mode<synchronous>, transform_indices = @transform_2, window_bounds = array<i64: 32, 2>}, {pipeline_mode = #tpu.pipeline_mode<synchronous>, transform_indices = @transform_3, window_bounds = array<i64: 32, 32>}, {transform_indices = @transform_4, window_bounds = array<i64: 1, 256>}]} {
    %c0 = arith.constant 0 : index
    %c0_0 = arith.constant 0 : index
    %0 = vector.load %arg3[%c0, %c0_0] : memref<32x2xf32, #tpu.memory_space<vmem>>, vector<32x2xf32>
    %1 = vector.extract_strided_slice %0 {offsets = [0, 0], sizes = [32, 1], strides = [1, 1]} : vector<32x2xf32> to vector<32x1xf32>
    %2 = vector.extract_strided_slice %0 {offsets = [0, 1], sizes = [32, 1], strides = [1, 1]} : vector<32x2xf32> to vector<32x1xf32>
    %c0_1 = arith.constant 0 : index
    %c0_2 = arith.constant 0 : index
    %3 = vector.load %arg2[%c0_1, %c0_2] : memref<32x48xf32, #tpu.memory_space<vmem>>, vector<32x48xf32>
    %c0_3 = arith.constant 0 : index
    %c0_4 = arith.constant 0 : index
    %4 = vector.load %arg1[%c0_3, %c0_4] : memref<256x48xf32, #tpu.memory_space<vmem>>, vector<256x48xf32>
    %cst = arith.constant dense<0.000000e+00> : vector<32x256xf32>
    %5 = tpu.matmul %3, %4, %cst {dimension_numbers = #tpu.dot_dimension_numbers<[1], [1], [0], [0], [0, 0, 1, 0], [], []>} : vector<32x48xf32>, vector<256x48xf32>, vector<32x256xf32> -> vector<32x256xf32>
    %6 = vector.broadcast %1 : vector<32x1xf32> to vector<32x256xf32>
    %7 = arith.addf %5, %6 : vector<32x256xf32>
    %8 = math.tanh %7 : vector<32x256xf32>
    %9 = arith.mulf %8, %8 : vector<32x256xf32>
    %cst_5 = arith.constant 1.000000e+00 : f32
    %10 = vector.broadcast %cst_5 : f32 to vector<32x256xf32>
    %11 = arith.subf %10, %9 : vector<32x256xf32>
    %12 = vector.broadcast %2 : vector<32x1xf32> to vector<32x256xf32>
    %13 = arith.mulf %11, %12 : vector<32x256xf32>
    %c0_6 = arith.constant 0 : index
    %c0_7 = arith.constant 0 : index
    %14 = vector.load %arg4[%c0_6, %c0_7] : memref<32x32xf32, #tpu.memory_space<vmem>>, vector<32x32xf32>
    %cst_8 = arith.constant dense<0.000000e+00> : vector<32x256xf32>
    %15 = tpu.matmul %14, %13, %cst_8 {dimension_numbers = #tpu.dot_dimension_numbers<[1], [0], [0], [1], [0, 0, 1, 1], [], []>} : vector<32x32xf32>, vector<32x256xf32>, vector<32x256xf32> -> vector<32x256xf32>
    %16 = arith.mulf %13, %15 : vector<32x256xf32>
    %cst_9 = arith.constant dense<0.000000e+00> : vector<256xf32>
    %17 = vector.multi_reduction <add>, %16, %cst_9 [0] : vector<32x256xf32> to vector<256xf32>
    %18 = vector.shape_cast %17 : vector<256xf32> to vector<1x256xf32>
    %cst_10 = arith.constant 0.000000e+00 : f32
    %19 = vector.broadcast %cst_10 : f32 to vector<1x256xf32>
    %20 = arith.maximumf %18, %19 : vector<1x256xf32>
    %cst_11 = arith.constant 1.000000e+06 : f32
    %21 = vector.broadcast %cst_11 : f32 to vector<1x256xf32>
    %22 = arith.mulf %20, %21 : vector<1x256xf32>
    %cst_12 = arith.constant 1.000000e+00 : f32
    %23 = vector.broadcast %cst_12 : f32 to vector<1x256xf32>
    %24 = arith.addf %22, %23 : vector<1x256xf32>
    %25 = math.log %24 : vector<1x256xf32>
    %cst_13 = arith.constant -5.000000e-01 : f32
    %26 = vector.broadcast %cst_13 : f32 to vector<1x256xf32>
    %27 = arith.mulf %26, %25 : vector<1x256xf32>
    %c0_14 = arith.constant 0 : index
    %c0_15 = arith.constant 0 : index
    %28 = vector.load %arg5[%c0_14, %c0_15] : memref<1x256xf32, #tpu.memory_space<vmem>>, vector<1x256xf32>
    tpu.vector_store %arg5[%c0_14, %c0_15], %27 {strides = array<i32>} : memref<1x256xf32, #tpu.memory_space<vmem>>, vector<1x256xf32>,
    return
  }
  func.func @transform_0(%arg0: i32) -> (i32, i32) {
    %c0_i32 = arith.constant 0 : i32
    %c0_i32_0 = arith.constant 0 : i32
    return %arg0, %c0_i32 : i32, i32
  }
  func.func @transform_1(%arg0: i32) -> (i32, i32) {
    %c0_i32 = arith.constant 0 : i32
    %c0_i32_0 = arith.constant 0 : i32
    %c0_i32_1 = arith.constant 0 : i32
    return %c0_i32, %c0_i32_0 : i32, i32
  }
  func.func @transform_2(%arg0: i32) -> (i32, i32) {
    %c0_i32 = arith.constant 0 : i32
    %c0_i32_0 = arith.constant 0 : i32
    %c0_i32_1 = arith.constant 0 : i32
    return %c0_i32, %c0_i32_0 : i32, i32
  }
  func.func @transform_3(%arg0: i32) -> (i32, i32) {
    %c0_i32 = arith.constant 0 : i32
    %c0_i32_0 = arith.constant 0 : i32
    %c0_i32_1 = arith.constant 0 : i32
    return %c0_i32, %c0_i32_0 : i32, i32
  }
  func.func @transform_4(%arg0: i32) -> (i32, i32) {
    %c0_i32 = arith.constant 0 : i32
    %c0_i32_0 = arith.constant 0 : i32
    return %c0_i32, %arg0 : i32, i32
  }
}

</mosaic_0001>

<llo_original>
// kernel: _lambda_.1
$region0: #{_lambda_.1}
  #allocation0 [shape = 'u32[]', space=smem, size = 0x4, offset = 0x4, fixed_abs, tag = 'smem constant byte address 0x4 - core index']
  #allocation1 [shape = 'u32[144,128]{1,0:T(1,128)}', space=vmem, size = 0x12000, scoped, tag = 'internal scratch']
  %s0 = inlined_call_operand.vmem [shape: f32[300,48], index: 0, kind: input, shape index: {}]
  %s1 = inlined_call_operand.vmem [shape: f32[32,48], index: 1, kind: input, shape index: {}]
  %s2 = inlined_call_operand.vmem [shape: f32[32,2], index: 2, kind: input, shape index: {}]
  %s3 = inlined_call_operand.vmem [shape: f32[32,32], index: 3, kind: input, shape index: {}]
  %s4 = inlined_call_operand.vmem [shape: f32[1,512], index: 4, kind: output, shape index: {}]
  %s5 = sld [smem:[#allocation0]]
  $region49: #{_lambda_.1} parent=0
    _
  %s7 = ssub.s32 1, %s5
  %s8 = scalar_select 0, %s7, %s5
  loop: start=0, step=1, limit=4
  $region2: #{_lambda_.1} parent=0 // loop_pre_header
    _
  $region3: #{_lambda_.1} parent=0 // loop_header
    %s10 = sphi 0, %s14
    %p11 = scmp.ge.s32.totalorder %s10, 4
    %s20 = sphi 0, %s22
    %s23 = sphi 0, %s20
    %s24 = sphi 0, %s23
    %s40 = sphi 0, %s24
    %s44 = sphi 0, %s44
    %s46 = sphi 0, %s44
    %s47 = sphi 0, %s46
    %s61 = sphi 0, %s47
    %s65 = sphi 0, %s65
    %s67 = sphi 0, %s65
    %s68 = sphi 0, %s67
    %s82 = sphi 0, %s68
    %s86 = sphi 0, %s86
    %s88 = sphi 0, %s86
    %s89 = sphi 0, %s88
    %s103 = sphi 0, %s89
    %s109 = sphi 0, %s111
    %s112 = sphi 0, %s109
    %s113 = sphi 0, %s112
    %s129 = sphi 0, %s113
  $region4: #{_lambda_.1} parent=0 // loop_header_branch
    %13 = sbr.rel (%p11) target = $region8
  $region5: #{_lambda_.1} parent=0 // loop_body
    %s15 = ssub.s32 %s10, 1
    %s16 = ssub.s32 %s10, 2
    %s17 = sadd.s32 %s10, 1
    %s18 = ssub.s32 %s10, %s17
    %p19 = scmp.eq.s32.totalorder %s18, 0
    %s21 = sadd.s32 %s20, 1
    %s22 = scalar_select %p19, %s20, %s21
    %p25 = pneg %p19
    %p26 = scmp.eq.s32.totalorder %s10, 1
    %p27 = por %p25, %p26
    %p28 = scmp.ne.s32.totalorder %s20, %s23
    %p29 = scmp.eq.s32.totalorder %s10, 0
    %p30 = por %p28, %p29
    %p31 = scmp.ne.s32.totalorder %s20, %s23
    %p32 = scmp.eq.s32.totalorder %s15, 1
    %p33 = por %p31, %p32
    %p34 = scmp.ne.s32.totalorder %s23, %s24
    %p35 = scmp.eq.s32.totalorder %s15, 0
    %p36 = por %p34, %p35
    %p37 = scmp.ne.s32.totalorder %s23, %s24
    %p38 = scmp.eq.s32.totalorder %s16, 1
    %p39 = por %p37, %p38
    %p41 = scmp.ne.s32.totalorder %s24, %s40
    %p42 = scmp.eq.s32.totalorder %s16, 0
    %p43 = por %p41, %p42
    %s45 = sadd.s32 %s44, 1
    %p48 = scmp.eq.s32.totalorder %s10, 1
    %p49 = scmp.ne.s32.totalorder %s44, %s46
    %p50 = scmp.eq.s32.totalorder %s10, 0
    %p51 = por %p49, %p50
    %p52 = scmp.ne.s32.totalorder %s44, %s46
    %p53 = scmp.eq.s32.totalorder %s15, 1
    %p54 = por %p52, %p53
    %p55 = scmp.ne.s32.totalorder %s46, %s47
    %p56 = scmp.eq.s32.totalorder %s15, 0
    %p57 = por %p55, %p56
    %p58 = scmp.ne.s32.totalorder %s46, %s47
    %p59 = scmp.eq.s32.totalorder %s16, 1
    %p60 = por %p58, %p59
    %p62 = scmp.ne.s32.totalorder %s47, %s61
    %p63 = scmp.eq.s32.totalorder %s16, 0
    %p64 = por %p62, %p63
    %s66 = sadd.s32 %s65, 1
    %p69 = scmp.eq.s32.totalorder %s10, 1
    %p70 = scmp.ne.s32.totalorder %s65, %s67
    %p71 = scmp.eq.s32.totalorder %s10, 0
    %p72 = por %p70, %p71
    %p73 = scmp.ne.s32.totalorder %s65, %s67
    %p74 = scmp.eq.s32.totalorder %s15, 1
    %p75 = por %p73, %p74
    %p76 = scmp.ne.s32.totalorder %s67, %s68
    %p77 = scmp.eq.s32.totalorder %s15, 0
    %p78 = por %p76, %p77
    %p79 = scmp.ne.s32.totalorder %s67, %s68
    %p80 = scmp.eq.s32.totalorder %s16, 1
    %p81 = por %p79, %p80
    %p83 = scmp.ne.s32.totalorder %s68, %s82
    %p84 = scmp.eq.s32.totalorder %s16, 0
    %p85 = por %p83, %p84
    %s87 = sadd.s32 %s86, 1
    %p90 = scmp.eq.s32.totalorder %s10, 1
    %p91 = scmp.ne.s32.totalorder %s86, %s88
    %p92 = scmp.eq.s32.totalorder %s10, 0
    %p93 = por %p91, %p92
    %p94 = scmp.ne.s32.totalorder %s86, %s88
    %p95 = scmp.eq.s32.totalorder %s15, 1
    %p96 = por %p94, %p95
    %p97 = scmp.ne.s32.totalorder %s88, %s89
    %p98 = scmp.eq.s32.totalorder %s15, 0
    %p99 = por %p97, %p98
    %p100 = scmp.ne.s32.totalorder %s88, %s89
    %p101 = scmp.eq.s32.totalorder %s16, 1
    %p102 = por %p100, %p101
    %p104 = scmp.ne.s32.totalorder %s89, %s103
    %p105 = scmp.eq.s32.totalorder %s16, 0
    %p106 = por %p104, %p105
    %s107 = ssub.s32 %s10, %s17
    %p108 = scmp.eq.s32.totalorder %s107, 0
    %s110 = sadd.s32 %s109, 1
    %s111 = scalar_select %p108, %s109, %s110
    %p114 = pneg %p108
    %p115 = scmp.eq.s32.totalorder %s10, 1
    %p116 = por %p114, %p115
    %p117 = scmp.ne.s32.totalorder %s109, %s112
    %p118 = scmp.eq.s32.totalorder %s10, 0
    %p119 = por %p117, %p118
    %p120 = scmp.ne.s32.totalorder %s109, %s112
    %p121 = scmp.eq.s32.totalorder %s15, 1
    %p122 = por %p120, %p121
    %p123 = scmp.ne.s32.totalorder %s112, %s113
    %p124 = scmp.eq.s32.totalorder %s15, 0
    %p125 = por %p123, %p124
    %p126 = scmp.ne.s32.totalorder %s112, %s113
    %p127 = scmp.eq.s32.totalorder %s16, 1
    %p128 = por %p126, %p127
    %p130 = scmp.ne.s32.totalorder %s113, %s129
    %p131 = scmp.eq.s32.totalorder %s16, 0
    %p132 = por %p130, %p131
    %p133 = scmp.le.s32.totalorder 1, %s10
    %p134 = scmp.lt.s32.totalorder %s10, 3
    %p135 = pnand %p133, %p134
    %p136 = pneg %p135
    // Predicated region
    $region9: #{_lambda_.1} parent=5 // pred_check
      _
    $region10: #{_lambda_.1} parent=5 // pred_check_branch
      %138 = sbr.rel (%p135) target = $region12
    $region11: #{_lambda_.1} parent=5 // pred_region
      %s139 = ssub.s32 %s10, 1
      // Predicated region
      $region13: #{_lambda_.1} parent=11 // pred_check
        %p140 = pneg %p57
      $region14: #{_lambda_.1} parent=11 // pred_check_branch
        %142 = sbr.rel (%p140) target = $region16
      $region15: #{_lambda_.1} parent=11 // pred_region
        _
      $region16: #{_lambda_.1} parent=11 // pred_fallthru
        _
      // Predicated region
      $region17: #{_lambda_.1} parent=11 // pred_check
        %p143 = pneg %p78
      $region18: #{_lambda_.1} parent=11 // pred_check_branch
        %145 = sbr.rel (%p143) target = $region20
      $region19: #{_lambda_.1} parent=11 // pred_region
        _
      $region20: #{_lambda_.1} parent=11 // pred_fallthru
        _
      // Predicated region
      $region21: #{_lambda_.1} parent=11 // pred_check
        %p146 = pneg %p99
      $region22: #{_lambda_.1} parent=11 // pred_check_branch
        %148 = sbr.rel (%p146) target = $region24
      $region23: #{_lambda_.1} parent=11 // pred_region
        _
      $region24: #{_lambda_.1} parent=11 // pred_fallthru
        _
    $region12: #{_lambda_.1} parent=5 // pred_fallthru
      _
    %p149 = scmp.lt.s32.totalorder %s10, 2
    // Predicated region
    $region25: #{_lambda_.1} parent=5 // pred_check
      %p150 = pneg %p149
    $region26: #{_lambda_.1} parent=5 // pred_check_branch
      %152 = sbr.rel (%p150) target = $region28
    $region27: #{_lambda_.1} parent=5 // pred_region
      // Predicated region
      $region29: #{_lambda_.1} parent=27 // pred_check
        %p153 = pneg %p30
      $region30: #{_lambda_.1} parent=27 // pred_check_branch
        %155 = sbr.rel (%p153) target = $region32
      $region31: #{_lambda_.1} parent=27 // pred_region
        %s156 = smul.u32 32, %s10
        %s157 = ssub.s32 38, %s156
        %p158 = scmp.lt.s32.totalorder %s157, 32
        %s159 = scalar_select %p158, %s157, 32
        %s160 = smul.u32 128, %s159
        %p161 = scmp.lt.s32.totalorder %s156, 37
        %s162 = scalar_select %p161, %s156, 37
        %s163 = smul.addr %s162, 8
        %s164 = scalar_lea.vmem %s0, %s163
        %s165 = smul.u32 32, %s10
        %s166 = ssub.s32 38, %s165
        %p167 = scmp.lt.s32.totalorder %s166, 32
        %s168 = scalar_select %p167, %s166, 32
        %s169 = smul.u32 128, %s168
      $region32: #{_lambda_.1} parent=27 // pred_fallthru
        _
    $region28: #{_lambda_.1} parent=5 // pred_fallthru
      _
    %p170 = scmp.le.s32.totalorder 1, %s10
    %p171 = scmp.lt.s32.totalorder %s10, 3
    %p172 = pnand %p170, %p171
    %p173 = pneg %p172
    // Predicated region
    $region33: #{_lambda_.1} parent=5 // pred_check
      _
    $region34: #{_lambda_.1} parent=5 // pred_check_branch
      %175 = sbr.rel (%p172) target = $region36
    $region35: #{_lambda_.1} parent=5 // pred_region
      %s176 = ssub.s32 %s10, 1
      %s177 = smul.u32 32, %s15
      %s178 = ssub.s32 38, %s177
      %p179 = scmp.lt.s32.totalorder %s178, 32
      %s180 = scalar_select %p179, %s178, 32
      %s181 = smul.u32 128, %s180
      %p182 = scmp.lt.s32.totalorder %s177, 37
      %s183 = scalar_select %p182, %s177, 37
      %s184 = smul.addr %s183, 8
      %s185 = scalar_lea.vmem %s0, %s184
      %p186 = pneg %p36
      %p187 = pneg %p33
      %p188 = pneg %p57
      %p189 = pneg %p54
      %p190 = pneg %p78
      %p191 = pneg %p75
      %p192 = pneg %p99
      %p193 = pneg %p96
      %p194 = pneg %p125
      %p195 = pneg %p122
      %s196 = smul.u32 2, %s15
      %p197 = scmp.lt.s32.totalorder %s196, 3
      %s198 = scalar_select %p197, %s196, 3
      %s199 = scalar_lea.vmem %s4, %s198
      %s200 = smul.u32 32, %s15
      %s201 = ssub.s32 38, %s200
      %p202 = scmp.lt.s32.totalorder %s201, 32
      %s203 = scalar_select %p202, %s201, 32
      %s204 = smul.u32 128, %s203
      %p205 = scmp.lt.s32.totalorder %s200, 37
      %s206 = scalar_select %p205, %s200, 37
      %s207 = smul.addr %s206, 8
      %s208 = scalar_lea.vmem %s0, %s207
      %s209 = smul.u32 32, %s15
      %s210 = ssub.s32 38, %s209
      %p211 = scmp.lt.s32.totalorder %s210, 32
      %s212 = scalar_select %p211, %s210, 32
      %s213 = smul.u32 128, %s212
      %s214 = smul.u32 2, %s15
      %p215 = scmp.lt.s32.totalorder %s214, 3
      %s216 = scalar_select %p215, %s214, 3
      %s217 = scalar_lea.vmem %s4, %s216
      %s218 = smul.u32 2, %s15
      %v219 = vld [vmem:[%s2] sm:$0xff]
      %v220 = vld [vmem:[%s2 + $0x8] sm:$0xff]
      %v221 = vld [vmem:[%s2 + $0x10] sm:$0xff]
      %v222 = vld [vmem:[%s2 + $0x18] sm:$0xff]
      %v223 = vld [vmem:[%s1] sm:$0xff]
      %v224 = vld [vmem:[%s1 + $0x8] sm:$0xff]
      %v225 = vld [vmem:[%s1 + $0x10] sm:$0xff]
      %v226 = vld [vmem:[%s1 + $0x18] sm:$0xff]
      %v227 = vld [vmem:[%s208] sm:$0xff]
      %v228 = vld [vmem:[%s208 + $0x8] sm:$0xff]
      %v229 = vld [vmem:[%s208 + $0x10] sm:$0xff]
      %v230 = vld [vmem:[%s208 + $0x18] sm:$0xff]
      %v231 = vld [vmem:[%s208 + $0x20] sm:$0xff]
      %v232 = vld [vmem:[%s208 + $0x28] sm:$0xff]
      %v233 = vld [vmem:[%s208 + $0x30] sm:$0xff]
      %v234 = vld [vmem:[%s208 + $0x38] sm:$0xff]
      %v235 = vld [vmem:[%s208 + $0x40] sm:$0xff]
      %v236 = vld [vmem:[%s208 + $0x48] sm:$0xff]
      %v237 = vld [vmem:[%s208 + $0x50] sm:$0xff]
      %v238 = vld [vmem:[%s208 + $0x58] sm:$0xff]
      %v239 = vld [vmem:[%s208 + $0x60] sm:$0xff]
      %v240 = vld [vmem:[%s208 + $0x68] sm:$0xff]
      %v241 = vld [vmem:[%s208 + $0x70] sm:$0xff]
      %v242 = vld [vmem:[%s208 + $0x78] sm:$0xff]
      %v243 = vld [vmem:[%s208 + $0x80] sm:$0xff]
      %v244 = vld [vmem:[%s208 + $0x88] sm:$0xff]
      %v245 = vld [vmem:[%s208 + $0x90] sm:$0xff]
      %v246 = vld [vmem:[%s208 + $0x98] sm:$0xff]
      %v247 = vld [vmem:[%s208 + $0xa0] sm:$0xff]
      %v248 = vld [vmem:[%s208 + $0xa8] sm:$0xff]
      %v249 = vld [vmem:[%s208 + $0xb0] sm:$0xff]
      %v250 = vld [vmem:[%s208 + $0xb8] sm:$0xff]
      %v251 = vld [vmem:[%s208 + $0xc0] sm:$0xff]
      %v252 = vld [vmem:[%s208 + $0xc8] sm:$0xff]
      %v253 = vld [vmem:[%s208 + $0xd0] sm:$0xff]
      %v254 = vld [vmem:[%s208 + $0xd8] sm:$0xff]
      %v255 = vld [vmem:[%s208 + $0xe0] sm:$0xff]
      %v256 = vld [vmem:[%s208 + $0xe8] sm:$0xff]
      %v257 = vld [vmem:[%s208 + $0xf0] sm:$0xff]
      %v258 = vld [vmem:[%s208 + $0xf8] sm:$0xff]
      %260 = vset.pattern.permute.xlu0 0
      %261 = vperm.xlu0 %260, %v219
      %v262 = vpop.permute.xlu0 %261
      %265 = vset.pattern.permute.xlu0 0
      %266 = vperm.xlu0 %265, %v220
      %v267 = vpop.permute.xlu0 %266
      %270 = vset.pattern.permute.xlu0 0
      %271 = vperm.xlu0 %270, %v221
      %v272 = vpop.permute.xlu0 %271
      %275 = vset.pattern.permute.xlu0 0
      %276 = vperm.xlu0 %275, %v222
      %v277 = vpop.permute.xlu0 %276
      %vm279 = vcmask 392192
      %v281 = vsel %vm279, %v223, 0
      %v284 = vsel %vm279, %v224, 0
      %v287 = vsel %vm279, %v225, 0
      %v290 = vsel %vm279, %v226, 0
      %v293 = vsel %vm279, %v227, 0
      %v296 = vsel %vm279, %v228, 0
      %v299 = vsel %vm279, %v229, 0
      %v302 = vsel %vm279, %v230, 0
      %v305 = vsel %vm279, %v231, 0
      %v308 = vsel %vm279, %v232, 0
      %v311 = vsel %vm279, %v233, 0
      %v314 = vsel %vm279, %v234, 0
      %v317 = vsel %vm279, %v235, 0
      %v320 = vsel %vm279, %v236, 0
      %v323 = vsel %vm279, %v237, 0
      %v326 = vsel %vm279, %v238, 0
      %v329 = vsel %vm279, %v239, 0
      %v332 = vsel %vm279, %v240, 0
      %v335 = vsel %vm279, %v241, 0
      %v338 = vsel %vm279, %v242, 0
      %v341 = vsel %vm279, %v243, 0
      %v344 = vsel %vm279, %v244, 0
      %v347 = vsel %vm279, %v245, 0
      %v350 = vsel %vm279, %v246, 0
      %v353 = vsel %vm279, %v247, 0
      %v356 = vsel %vm279, %v248, 0
      %v359 = vsel %vm279, %v249, 0
      %v362 = vsel %vm279, %v250, 0
      %v365 = vsel %vm279, %v251, 0
      %v368 = vsel %vm279, %v252, 0
      %v371 = vsel %vm279, %v253, 0
      %v374 = vsel %vm279, %v254, 0
      %v377 = vsel %vm279, %v255, 0
      %v380 = vsel %vm279, %v256, 0
      %v383 = vsel %vm279, %v257, 0
      %v386 = vsel %vm279, %v258, 0
      %388 = vmatprep.subr.mxu0 0.0
      %389 = vmatpush1.xpose.msra.mxu0 %v293
      %390 = vmatprep.subr.mxu0 0.0
      %391 = vmatpush1.xpose.msra.mxu0 %v296
      %392 = vmatprep.subr.mxu0 0.0
      %393 = vmatpush1.xpose.msra.mxu0 %v299
      %394 = vmatprep.subr.mxu0 0.0
      %395 = vmatpush1.xpose.msra.mxu0 %v302
      %396 = vmatprep.subr.mxu0 0.0
      %397 = vmatpush1.xpose.msra.mxu0 %v305
      %398 = vmatprep.subr.mxu0 0.0
      %399 = vmatpush1.xpose.msra.mxu0 %v308
      %400 = vmatprep.subr.mxu0 0.0
      %401 = vmatpush1.xpose.msra.mxu0 %v311
      %402 = vmatprep.subr.mxu0 0.0
      %403 = vmatpush1.xpose.msra.mxu0 %v314
      %404 = vmatprep.subr.mxu0 0.0
      %405 = vmatpush1.xpose.msra.mxu0 %v317
      %406 = vmatprep.subr.mxu0 0.0
      %407 = vmatpush1.xpose.msra.mxu0 %v320
      %408 = vmatprep.subr.mxu0 0.0
      %409 = vmatpush1.xpose.msra.mxu0 %v323
      %410 = vmatprep.subr.mxu0 0.0
      %411 = vmatpush1.xpose.msra.mxu0 %v326
      %412 = vmatprep.subr.mxu0 0.0
      %413 = vmatpush1.xpose.msra.mxu0 %v329
      %414 = vmatprep.subr.mxu0 0.0
      %415 = vmatpush1.xpose.msra.mxu0 %v332
      %416 = vmatprep.subr.mxu0 0.0
      %417 = vmatpush1.xpose.msra.mxu0 %v335
      %418 = vmatprep.subr.mxu0 0.0
      %419 = vmatpush1.xpose.msra.mxu0 %v338
      %420 = vmatprep.subr.mxu0 0.0
      %421 = vmatpush1.xpose.msra.mxu0 %v341
      %422 = vmatprep.subr.mxu0 0.0
      %423 = vmatpush1.xpose.msra.mxu0 %v344
      %424 = vmatprep.subr.mxu0 0.0
      %425 = vmatpush1.xpose.msra.mxu0 %v347
      %426 = vmatprep.subr.mxu0 0.0
      %427 = vmatpush1.xpose.msra.mxu0 %v350
      %428 = vmatprep.subr.mxu0 0.0
      %429 = vmatpush1.xpose.msra.mxu0 %v353
      %430 = vmatprep.subr.mxu0 0.0
      %431 = vmatpush1.xpose.msra.mxu0 %v356
      %432 = vmatprep.subr.mxu0 0.0
      %433 = vmatpush1.xpose.msra.mxu0 %v359
      %434 = vmatprep.subr.mxu0 0.0
      %435 = vmatpush1.xpose.msra.mxu0 %v362
      %436 = vmatprep.subr.mxu0 0.0
      %437 = vmatpush1.xpose.msra.mxu0 %v365
      %438 = vmatprep.subr.mxu0 0.0
      %439 = vmatpush1.xpose.msra.mxu0 %v368
      %440 = vmatprep.subr.mxu0 0.0
      %441 = vmatpush1.xpose.msra.mxu0 %v371
      %442 = vmatprep.subr.mxu0 0.0
      %443 = vmatpush1.xpose.msra.mxu0 %v374
      %444 = vmatprep.subr.mxu0 0.0
      %445 = vmatpush1.xpose.msra.mxu0 %v377
      %446 = vmatprep.subr.mxu0 0.0
      %447 = vmatpush1.xpose.msra.mxu0 %v380
      %448 = vmatprep.subr.mxu0 0.0
      %449 = vmatpush1.xpose.msra.mxu0 %v383
      %450 = vmatprep.subr.mxu0 0.0
      %451 = vmatpush1.xpose.msra.mxu0 %v386
      %452 = vmatprep.mubr.f32.mxu0 0.0
      %453 = vmatmul.mubr.f32.gmra.mrb[0].mxu0 %v281
      %v454 = vpop.f32.mrb[0].mxu0
      %v455 = vadd.f32 %v262, %v454
      %v456 = vpop.f32.mrb[0].mxu0
      %v457 = vadd.f32 %v262, %v456
      %458 = vmatprep.mubr.f32.mxu0 0.0
      %459 = vmatmul.mubr.f32.gmra.mrb[0].mxu0 %v284
      %v460 = vpop.f32.mrb[0].mxu0
      %v461 = vadd.f32 %v267, %v460
      %v462 = vpop.f32.mrb[0].mxu0
      %v463 = vadd.f32 %v267, %v462
      %464 = vmatprep.mubr.f32.mxu0 0.0
      %465 = vmatmul.mubr.f32.gmra.mrb[0].mxu0 %v287
      %v466 = vpop.f32.mrb[0].mxu0
      %v467 = vadd.f32 %v272, %v466
      %v468 = vpop.f32.mrb[0].mxu0
      %v469 = vadd.f32 %v272, %v468
      %470 = vmatprep.mubr.f32.mxu0 0.0
      %471 = vmatmul.mubr.f32.gmra.mrb[0].mxu0 %v290
      %v472 = vpop.f32.mrb[0].mxu0
      %v473 = vadd.f32 %v277, %v472
      %v474 = vpop.f32.mrb[0].mxu0
      %v475 = vadd.f32 %v277, %v474
      %476 = vdwg.mxu0
      %v477 = vtanh.pop %v455
      %v478 = vtanh.pop %v457
      %v479 = vtanh.pop %v461
      %v480 = vtanh.pop %v463
      %v481 = vtanh.pop %v467
      %v482 = vtanh.pop %v469
      %v483 = vtanh.pop %v473
      %v484 = vtanh.pop %v475
      %v485 = vmul.f32 %v477, %v477
      %v486 = vmul.f32 %v478, %v478
      %v487 = vmul.f32 %v479, %v479
      %v488 = vmul.f32 %v480, %v480
      %v489 = vmul.f32 %v481, %v481
      %v490 = vmul.f32 %v482, %v482
      %v491 = vmul.f32 %v483, %v483
      %v492 = vmul.f32 %v484, %v484
      %v493 = vsub.f32 1.0, %v485
      %v494 = vsub.f32 1.0, %v486
      %v495 = vsub.f32 1.0, %v487
      %v496 = vsub.f32 1.0, %v488
      %v497 = vsub.f32 1.0, %v489
      %v498 = vsub.f32 1.0, %v490
      %v499 = vsub.f32 1.0, %v491
      %v500 = vsub.f32 1.0, %v492
      %501 = vset.pattern.permute.xlu0 1
      %502 = vperm.xlu0 %501, %v219
      %v503 = vpop.permute.xlu0 %502
      %505 = vset.pattern.permute.xlu0 1
      %506 = vperm.xlu0 %505, %v220
      %v507 = vpop.permute.xlu0 %506
      %509 = vset.pattern.permute.xlu0 1
      %510 = vperm.xlu0 %509, %v221
      %v511 = vpop.permute.xlu0 %510
      %513 = vset.pattern.permute.xlu0 1
      %514 = vperm.xlu0 %513, %v222
      %v515 = vpop.permute.xlu0 %514
      %v517 = vmul.f32 %v493, %v503
      %v518 = vmul.f32 %v494, %v503
      %v519 = vmul.f32 %v495, %v507
      %v520 = vmul.f32 %v496, %v507
      %v521 = vmul.f32 %v497, %v511
      %v522 = vmul.f32 %v498, %v511
      %v523 = vmul.f32 %v499, %v515
      %v524 = vmul.f32 %v500, %v515
      %v525 = vld [vmem:[%s3] sm:$0xff]
      %v526 = vld [vmem:[%s3 + $0x8] sm:$0xff]
      %v527 = vld [vmem:[%s3 + $0x10] sm:$0xff]
      %v528 = vld [vmem:[%s3 + $0x18] sm:$0xff]
      %vm529 = vcmask 261120
      %v531 = vsel %vm529, %v525, 0
      %v534 = vsel %vm529, %v526, 0
      %v537 = vsel %vm529, %v527, 0
      %v540 = vsel %vm529, %v528, 0
      %542 = vmatprep.subr.mxu0 %v518
      %543 = vmatpush1.msra.mxu0 %v517
      %544 = vmatprep.subr.mxu0 %v520
      %545 = vmatpush1.msra.mxu0 %v519
      %546 = vmatprep.subr.mxu0 %v522
      %547 = vmatpush1.msra.mxu0 %v521
      %548 = vmatprep.subr.mxu0 %v524
      %549 = vmatpush1.msra.mxu0 %v523
      %550 = vmatprep.subr.mxu0 0.0
      %551 = vmatpush1.msra.mxu0 0.0
      %552 = vmatprep.subr.mxu0 0.0
      %553 = vmatpush1.msra.mxu0 0.0
      %554 = vmatprep.subr.mxu0 0.0
      %555 = vmatpush1.msra.mxu0 0.0
      %556 = vmatprep.subr.mxu0 0.0
      %557 = vmatpush1.msra.mxu0 0.0
      %558 = vmatprep.subr.mxu0 0.0
      %559 = vmatpush1.msra.mxu0 0.0
      %560 = vmatprep.subr.mxu0 0.0
      %561 = vmatpush1.msra.mxu0 0.0
      %562 = vmatprep.subr.mxu0 0.0
      %563 = vmatpush1.msra.mxu0 0.0
      %564 = vmatprep.subr.mxu0 0.0
      %565 = vmatpush1.msra.mxu0 0.0
      %566 = vmatprep.subr.mxu0 0.0
      %567 = vmatpush1.msra.mxu0 0.0
      %568 = vmatprep.subr.mxu0 0.0
      %569 = vmatpush1.msra.mxu0 0.0
      %570 = vmatprep.subr.mxu0 0.0
      %571 = vmatpush1.msra.mxu0 0.0
      %572 = vmatprep.subr.mxu0 0.0
      %573 = vmatpush1.msra.mxu0 0.0
      %574 = vmatprep.subr.mxu0 0.0
      %575 = vmatpush1.msra.mxu0 0.0
      %576 = vmatprep.subr.mxu0 0.0
      %577 = vmatpush1.msra.mxu0 0.0
      %578 = vmatprep.subr.mxu0 0.0
      %579 = vmatpush1.msra.mxu0 0.0
      %580 = vmatprep.subr.mxu0 0.0
      %581 = vmatpush1.msra.mxu0 0.0
      %582 = vmatprep.subr.mxu0 0.0
      %583 = vmatpush1.msra.mxu0 0.0
      %584 = vmatprep.subr.mxu0 0.0
      %585 = vmatpush1.msra.mxu0 0.0
      %586 = vmatprep.subr.mxu0 0.0
      %587 = vmatpush1.msra.mxu0 0.0
      %588 = vmatprep.subr.mxu0 0.0
      %589 = vmatpush1.msra.mxu0 0.0
      %590 = vmatprep.subr.mxu0 0.0
      %591 = vmatpush1.msra.mxu0 0.0
      %592 = vmatprep.subr.mxu0 0.0
      %593 = vmatpush1.msra.mxu0 0.0
      %594 = vmatprep.subr.mxu0 0.0
      %595 = vmatpush1.msra.mxu0 0.0
      %596 = vmatprep.subr.mxu0 0.0
      %597 = vmatpush1.msra.mxu0 0.0
      %598 = vmatprep.subr.mxu0 0.0
      %599 = vmatpush1.msra.mxu0 0.0
      %600 = vmatprep.subr.mxu0 0.0
      %601 = vmatpush1.msra.mxu0 0.0
      %602 = vmatprep.subr.mxu0 0.0
      %603 = vmatpush1.msra.mxu0 0.0
      %604 = vmatprep.subr.mxu0 0.0
      %605 = vmatpush1.msra.mxu0 0.0
      %606 = vmatprep.mubr.f32.mxu0 0.0
      %607 = vmatmul.mubr.f32.gmra.mrb[0].mxu0 %v531
      %v608 = vpop.f32.mrb[0].mxu0
      %v609 = vadd.f32 0.0, %v608
      %v610 = vpop.f32.mrb[0].mxu0
      %v611 = vadd.f32 0.0, %v610
      %612 = vmatprep.mubr.f32.mxu0 0.0
      %613 = vmatmul.mubr.f32.gmra.mrb[0].mxu0 %v534
      %v614 = vpop.f32.mrb[0].mxu0
      %v615 = vadd.f32 0.0, %v614
      %v616 = vpop.f32.mrb[0].mxu0
      %v617 = vadd.f32 0.0, %v616
      %618 = vmatprep.mubr.f32.mxu0 0.0
      %619 = vmatmul.mubr.f32.gmra.mrb[0].mxu0 %v537
      %v620 = vpop.f32.mrb[0].mxu0
      %v621 = vadd.f32 0.0, %v620
      %v622 = vpop.f32.mrb[0].mxu0
      %v623 = vadd.f32 0.0, %v622
      %624 = vmatprep.mubr.f32.mxu0 0.0
      %625 = vmatmul.mubr.f32.gmra.mrb[0].mxu0 %v540
      %v626 = vpop.f32.mrb[0].mxu0
      %v627 = vadd.f32 0.0, %v626
      %v628 = vpop.f32.mrb[0].mxu0
      %v629 = vadd.f32 0.0, %v628
      %630 = vdwg.mxu0
      %v631 = vmul.f32 %v517, %v609
      %v632 = vmul.f32 %v518, %v611
      %v633 = vmul.f32 %v519, %v615
      %v634 = vmul.f32 %v520, %v617
      %v635 = vmul.f32 %v521, %v621
      %v636 = vmul.f32 %v522, %v623
      %v637 = vmul.f32 %v523, %v627
      %v638 = vmul.f32 %v524, %v629
      %v639 = vadd.f32 %v631, %v633
      %v640 = vadd.f32 %v639, %v635
      %v641 = vadd.f32 %v640, %v637
      %v642 = vrot.slane %v641, 4
      %v643 = vadd.f32 %v641, %v642
      %v644 = vrot.slane %v643, 2
      %v645 = vadd.f32 %v643, %v644
      %v646 = vrot.slane %v645, 1
      %v647 = vadd.f32 %v645, %v646
      %v648 = vadd.f32 %v632, %v634
      %v649 = vadd.f32 %v648, %v636
      %v650 = vadd.f32 %v649, %v638
      %v651 = vrot.slane %v650, 4
      %v652 = vadd.f32 %v650, %v651
      %v653 = vrot.slane %v652, 2
      %v654 = vadd.f32 %v652, %v653
      %v655 = vrot.slane %v654, 1
      %v656 = vadd.f32 %v654, %v655
      %v657 = vmax.f32 %v647, 0.0
      %v658 = vmax.f32 %v656, 0.0
      %v659 = vmul.f32 %v657, 1000000.0
      %v660 = vmul.f32 %v658, 1000000.0
      %v661 = vadd.f32 %v659, 1.0
      %v662 = vadd.f32 %v660, 1.0
      %v663 = vlog2.pop %v661
      %v664 = vmul.f32 %v663, 0.6931472
      %v665 = vlog2.pop %v662
      %v666 = vmul.f32 %v665, 0.6931472
      %v667 = vmul.f32 %v664, -0.5
      %v668 = vmul.f32 %v666, -0.5
      %v671 = vcombine.low %v667, %v668
      %v673 = vunpack.c.l.s4 1966171168
      %v674 = vunpack.c.0.s8 %v673
      %v675 = vlaneseq
      %v676 = vshrl.u32 %v675, 7
      %v677 = vsub.s32 %v674, %v676
      %v678 = vrot.slane %v671, %v677
      %v680 = vunpack.c.l.s4 1966171168
      %v681 = vunpack.c.0.s8 %v680
      %v682 = vlaneseq
      %v683 = vshrl.u32 %v682, 7
      %v684 = vsub.s32 %v681, %v683
      %v685 = vrot.slane %v678, %v684
      %v687 = vlaneseq
      %vm688 = vcmp.ge.s32.totalorder %v687, 0
      %vm689 = vcmp.lt.s32.totalorder %v687, 256
      %vm690 = vmand %vm688, %vm689
      %691 = vst.msk [vmem:[%s217] sm:$0x3] %vm690, %v685
      %s692 = smul.u32 2, %s15
      %p693 = scmp.lt.s32.totalorder %s692, 3
      %s694 = scalar_select %p693, %s692, 3
      %s695 = scalar_lea.vmem %s4, %s694
      // Predicated region
      $region37: #{_lambda_.1} parent=35 // pred_check
        %p696 = pneg %p122
      $region38: #{_lambda_.1} parent=35 // pred_check_branch
        %698 = sbr.rel (%p696) target = $region40
      $region39: #{_lambda_.1} parent=35 // pred_region
        %s699 = smul.u32 2, %s15
      $region40: #{_lambda_.1} parent=35 // pred_fallthru
        _
    $region36: #{_lambda_.1} parent=5 // pred_fallthru
      _
    %p700 = scmp.le.s32.totalorder 2, %s10
    // Predicated region
    $region41: #{_lambda_.1} parent=5 // pred_check
      %p701 = pneg %p700
    $region42: #{_lambda_.1} parent=5 // pred_check_branch
      %703 = sbr.rel (%p701) target = $region44
    $region43: #{_lambda_.1} parent=5 // pred_region
      %s704 = ssub.s32 %s10, 2
      // Predicated region
      $region45: #{_lambda_.1} parent=43 // pred_check
        %p705 = pneg %p128
      $region46: #{_lambda_.1} parent=43 // pred_check_branch
        %707 = sbr.rel (%p705) target = $region48
      $region47: #{_lambda_.1} parent=43 // pred_region
        %s708 = smul.u32 2, %s16
        %p709 = scmp.lt.s32.totalorder %s708, 3
        %s710 = scalar_select %p709, %s708, 3
        %s711 = scalar_lea.vmem %s4, %s710
      $region48: #{_lambda_.1} parent=43 // pred_fallthru
        _
    $region44: #{_lambda_.1} parent=5 // pred_fallthru
      _
  $region6: #{_lambda_.1} parent=0 // loop_footer
    %s14 = sadd.s32 1, %s10
  $region7: #{_lambda_.1} parent=0 // loop_footer_branch
    %9 = sbr.rel target = $region3
  $region8: #{_lambda_.1} parent=0 // loop_exit
    _

</llo_original>
